<compile_context>
chip_gen: v6e
topology: v6e:2x2x1
jax: 0.10.0
libtpu: 0.0.40
codegen_flags: <defaults>
</compile_context>

<pallas_src>
import functools

import jax
import jax.numpy as jnp
from jax.experimental import pallas as pl
from jax.experimental.pallas import tpu as pltpu


def attn_block3d_kernel(x_full_ref,
                        qw_ref, qb_ref, kw_ref, kb_ref, vw_ref, vb_ref,
                        pw_ref, pb_ref,
                        o_ref,
                        k_scr, v_scr, stats_ref,
                        *, n_valid, tq, eps):
    qi = pl.program_id(1)
    c, n_pad = x_full_ref.shape[1], x_full_ref.shape[2]

    # ---- once per batch element: GroupNorm stats + K/V projections ----
    @pl.when(qi == 0)
    def _():
        x = x_full_ref[0].astype(jnp.float32)                    # (C, Npad)
        # single-pass stats; padded lanes are zero so the sums are exact
        inv_cnt = 1.0 / (c * n_valid)
        mean = jnp.sum(x) * inv_cnt
        var = jnp.sum(x * x) * inv_cnt - mean * mean
        rstd = jax.lax.rsqrt(var + eps)
        stats_ref[0] = mean
        stats_ref[1] = rstd
        xn = ((x - mean) * rstd).astype(jnp.bfloat16)            # (C, Npad)
        k_scr[...] = (jnp.dot(kw_ref[...], xn,
                              preferred_element_type=jnp.float32)
                      + kb_ref[...]).astype(jnp.bfloat16)
        v_scr[...] = (jnp.dot(vw_ref[...], xn,
                              preferred_element_type=jnp.float32)
                      + vb_ref[...]).astype(jnp.bfloat16)

    mean = stats_ref[0]
    rstd = stats_ref[1]

    # ---- query tile sliced from the resident full-x VMEM block ----
    q_start = pl.multiple_of(qi * tq, 128)
    x_tile = x_full_ref[0, :, pl.ds(q_start, tq)].astype(jnp.float32)  # (C, Tq)
    xn_tile = ((x_tile - mean) * rstd).astype(jnp.bfloat16)
    # q = q_w' @ xn_tile  (GroupNorm affine + 1/sqrt(C) pre-folded into q_w/q_b)
    q = (jnp.dot(qw_ref[...], xn_tile,
                 preferred_element_type=jnp.float32) + qb_ref[...])  # (C, Tq)

    # ---- scores s[i, j] = sum_c q[c, i] * k[c, j]  (contract over C) ----
    s = jax.lax.dot_general(
        q.astype(jnp.bfloat16), k_scr[...],
        dimension_numbers=(((0,), (0,)), ((), ())),
        preferred_element_type=jnp.float32)                      # (Tq, Npad)
    if n_pad > n_valid:                                          # mask padded keys
        key_idx = jax.lax.broadcasted_iota(jnp.int32, (1, n_pad), 1)
        s = s + jnp.where(key_idx < n_valid,
                          jnp.float32(0.0), jnp.float32(-1e30))

    # ---- softmax over keys (f32) ----
    m = jnp.max(s, axis=-1, keepdims=True)
    p = jnp.exp(s - m)
    denom = jnp.sum(p, axis=-1, keepdims=True)
    p = p * pl.reciprocal(denom, approx=True)

    # ---- h[c, i] = sum_j v[c, j] * p[i, j]  (contract over keys, no .T) ----
    h = jax.lax.dot_general(
        v_scr[...], p.astype(jnp.bfloat16),
        dimension_numbers=(((1,), (1,)), ((), ())),
        preferred_element_type=jnp.float32)                      # (C, Tq)

    # ---- proj (1x1x1 conv) + residual ----
    h = (jnp.dot(pw_ref[...], h.astype(jnp.bfloat16),
                 preferred_element_type=jnp.float32) + pb_ref[...])
    o_ref[0] = (x_tile + h).astype(o_ref.dtype)


def attn_block3d(x, params, *, tq=256):
    """x: (B, C, H, W, D) float32. params: dict of weights (see init_params)."""
    B, C, H, W, D = x.shape
    N = H * W * D
    scale = float(C) ** (-0.5)

    # lane-dense padding of the flattened spatial axis
    n_pad = pl.cdiv(N, 128) * 128
    if n_pad % tq != 0:
        tq = 128
    tq = min(tq, n_pad)
    num_q_tiles = n_pad // tq

    x_flat = x.reshape(B, C, N)
    if n_pad != N:
        x_flat = jnp.pad(x_flat, ((0, 0), (0, 0), (0, n_pad - N)))

    # ---- host-side weight folding ----
    f32, bf16 = jnp.float32, jnp.bfloat16
    gn_w = params["gn_w"].astype(f32)
    gn_b = params["gn_b"].astype(f32)
    qkv_w = params["qkv_w"].astype(f32)                 # (3C, C)
    qkv_b = params["qkv_b"].astype(f32)                 # (3C,)
    w_fold = qkv_w * gn_w[None, :]                      # GroupNorm affine fold
    b_fold = qkv_b + qkv_w @ gn_b
    q_w, k_w, v_w = w_fold[:C], w_fold[C:2 * C], w_fold[2 * C:]
    q_b, k_b, v_b = b_fold[:C], b_fold[C:2 * C], b_fold[2 * C:]
    q_w, q_b = q_w * scale, q_b * scale                 # softmax scale fold

    q_w, k_w, v_w = q_w.astype(bf16), k_w.astype(bf16), v_w.astype(bf16)
    proj_w = params["proj_w"].astype(bf16)              # bf16 MXU operands
    q_b, k_b, v_b = q_b.reshape(C, 1), k_b.reshape(C, 1), v_b.reshape(C, 1)
    proj_b = params["proj_b"].astype(f32).reshape(C, 1)

    kernel = functools.partial(attn_block3d_kernel, n_valid=N, tq=tq, eps=1e-6)
    full = lambda shape: pl.BlockSpec(shape, lambda b, qi: (0,) * len(shape))

    vmem_bytes = (
        2 * C * n_pad * 4          # full-x block (double-buffered)
        + 2 * C * tq * 4           # output tile (double-buffered)
        + 2 * C * n_pad * 2        # K/V bf16 scratch
        + 3 * tq * n_pad * 4       # score tile + softmax temporaries
        + C * n_pad * 6            # xn temporaries at query-tile 0 (f32 + bf16)
        + 8 * C * C * 4            # weights + biases (generous)
        + (2 << 20)                # headroom
    )
    vmem_limit = int(min(max(vmem_bytes, 16 << 20), 64 << 20))

    out_flat = pl.pallas_call(
        kernel,
        out_shape=jax.ShapeDtypeStruct((B, C, n_pad), x.dtype),
        grid_spec=pltpu.PrefetchScalarGridSpec(
            num_scalar_prefetch=0,
            grid=(B, num_q_tiles),
            in_specs=[
                pl.BlockSpec((1, C, n_pad), lambda b, qi: (b, 0, 0)),  # x (full)
                full((C, C)), full((C, 1)),    # q_w, q_b
                full((C, C)), full((C, 1)),    # k_w, k_b
                full((C, C)), full((C, 1)),    # v_w, v_b
                full((C, C)), full((C, 1)),    # proj_w, proj_b
            ],
            out_specs=pl.BlockSpec((1, C, tq), lambda b, qi: (b, 0, qi)),
            scratch_shapes=[
                pltpu.VMEM((C, n_pad), jnp.bfloat16),   # K (resident per batch)
                pltpu.VMEM((C, n_pad), jnp.bfloat16),   # V (resident per batch)
                pltpu.SMEM((2,), jnp.float32),          # GroupNorm mean, rstd
            ],
        ),
        compiler_params=pltpu.CompilerParams(
            dimension_semantics=("parallel", "arbitrary"),
            vmem_limit_bytes=vmem_limit,
        ),
    )(x_flat, q_w, q_b, k_w, k_b, v_w, v_b, proj_w, proj_b)

    return out_flat[:, :, :N].reshape(B, C, H, W, D)


def init_params(key, C):
    """Deterministic synthetic parameters matching the module's shapes."""
    k1, k2, k3, k4, k5, k6 = jax.random.split(key, 6)
    return {
        "gn_w": 1.0 + 0.1 * jax.random.normal(k5, (C,), jnp.float32),
        "gn_b": 0.1 * jax.random.normal(k6, (C,), jnp.float32),
        "qkv_w": 0.05 * jax.random.normal(k1, (3 * C, C), jnp.float32),
        "qkv_b": 0.05 * jax.random.normal(k2, (3 * C,), jnp.float32),
        "proj_w": 0.05 * jax.random.normal(k3, (C, C), jnp.float32),
        "proj_b": 0.05 * jax.random.normal(k4, (C,), jnp.float32),
    }


def attn_block3d_reference(x, params):
    """Pure-JAX reference (same math as the PyTorch module), f32 throughout."""
    B, C, H, W, D = x.shape
    N = H * W * D
    scale = float(C) ** (-0.5)
    xf = x.reshape(B, C, N).astype(jnp.float32)
    mean = jnp.mean(xf, axis=(1, 2), keepdims=True)
    var = jnp.mean((xf - mean) ** 2, axis=(1, 2), keepdims=True)
    xn = (xf - mean) / jnp.sqrt(var + 1e-6)
    xn = xn * params["gn_w"][None, :, None] + params["gn_b"][None, :, None]
    qkv = jnp.einsum("oc,bcn->bon", params["qkv_w"], xn) + params["qkv_b"][None, :, None]
    q, k, v = qkv[:, 0:C], qkv[:, C:2 * C], qkv[:, 2 * C:3 * C]
    w = jnp.einsum("bcq,bck->bqk", q, k) * scale
    w = jax.nn.softmax(w, axis=-1)
    h = jnp.einsum("bqk,bck->bcq", w, v)
    h = jnp.einsum("oc,bcn->bon", params["proj_w"], h) + params["proj_b"][None, :, None]
    return (xf + h).reshape(B, C, H, W, D)


if __name__ == "__main__":
    key = jax.random.PRNGKey(0)
    kx, kp = jax.random.split(key)

    B, C, H, W, D = 2, 8, 4, 4, 4
    x = jax.random.normal(kx, (B, C, H, W, D), jnp.float32)
    params = init_params(kp, C)

    out = jax.block_until_ready(attn_block3d(x, params))
    ref = attn_block3d_reference(x, params)

    assert out.shape == (B, C, H, W, D)
    err = float(jnp.max(jnp.abs(out - ref)))
    assert err < 2e-2, f"Pallas kernel mismatch vs reference: max abs err {err}"

    print("KERNEL_OK")
</pallas_src>

<mosaic_0001>
module attributes {stable_mosaic.version = 11 : i64} {
  func.func @attn_block3d_kernel(%arg0: i32, %arg1: i32, %arg2: memref<1x8x128xf32, #tpu.memory_space<vmem>>, %arg3: memref<8x8xbf16, #tpu.memory_space<vmem>>, %arg4: memref<8x1xf32, #tpu.memory_space<vmem>>, %arg5: memref<8x8xbf16, #tpu.memory_space<vmem>>, %arg6: memref<8x1xf32, #tpu.memory_space<vmem>>, %arg7: memref<8x8xbf16, #tpu.memory_space<vmem>>, %arg8: memref<8x1xf32, #tpu.memory_space<vmem>>, %arg9: memref<8x8xbf16, #tpu.memory_space<vmem>>, %arg10: memref<8x1xf32, #tpu.memory_space<vmem>>, %arg11: memref<1x8x128xf32, #tpu.memory_space<vmem>>, %arg12: memref<8x128xbf16, #tpu.memory_space<vmem>>, %arg13: memref<8x128xbf16, #tpu.memory_space<vmem>>, %arg14: memref<2xf32, #tpu.memory_space<smem>>) attributes {dimension_semantics = [#tpu.dimension_semantics<parallel>, #tpu.dimension_semantics<arbitrary>], iteration_bounds = array<i64: 2, 1>, scalar_prefetch = 0 : i64, scratch_operands = 3 : i64, tpu.core_type = #tpu.core_type<tc>, window_params = [{transform_indices = @transform_0, window_bounds = array<i64: 1, 8, 128>}, {pipeline_mode = #tpu.pipeline_mode<synchronous>, transform_indices = @transform_1, window_bounds = array<i64: 8, 8>}, {pipeline_mode = #tpu.pipeline_mode<synchronous>, transform_indices = @transform_2, window_bounds = array<i64: 8, 1>}, {pipeline_mode = #tpu.pipeline_mode<synchronous>, transform_indices = @transform_3, window_bounds = array<i64: 8, 8>}, {pipeline_mode = #tpu.pipeline_mode<synchronous>, transform_indices = @transform_4, window_bounds = array<i64: 8, 1>}, {pipeline_mode = #tpu.pipeline_mode<synchronous>, transform_indices = @transform_5, window_bounds = array<i64: 8, 8>}, {pipeline_mode = #tpu.pipeline_mode<synchronous>, transform_indices = @transform_6, window_bounds = array<i64: 8, 1>}, {pipeline_mode = #tpu.pipeline_mode<synchronous>, transform_indices = @transform_7, window_bounds = array<i64: 8, 8>}, {pipeline_mode = #tpu.pipeline_mode<synchronous>, transform_indices = @transform_8, window_bounds = array<i64: 8, 1>}, {transform_indices = @transform_9, window_bounds = array<i64: 1, 8, 128>}]} {
    %c0_i32 = arith.constant 0 : i32
    %0 = arith.cmpi eq, %arg1, %c0_i32 : i32
    %1 = arith.extui %0 : i1 to i32
    %c0_i32_0 = arith.constant 0 : i32
    %2 = arith.cmpi ne, %1, %c0_i32_0 : i32
    scf.if %2 {
      %c0_25 = arith.constant 0 : index
      %c0_26 = arith.constant 0 : index
      %c0_27 = arith.constant 0 : index
      %54 = vector.load %arg2[%c0_25, %c0_26, %c0_27] : memref<1x8x128xf32, #tpu.memory_space<vmem>>, vector<1x8x128xf32>
      %55 = vector.shape_cast %54 : vector<1x8x128xf32> to vector<8x128xf32>
      %56 = vector.shape_cast %55 : vector<8x128xf32> to vector<1x8x128xf32>
      %cst_28 = arith.constant dense<0.000000e+00> : vector<1xf32>
      %57 = vector.multi_reduction <add>, %56, %cst_28 [1, 2] : vector<1x8x128xf32> to vector<1xf32>
      %58 = vector.shape_cast %57 : vector<1xf32> to vector<1x1x1xf32>
      %59 = vector.extract %58[0, 0, 0] : f32 from vector<1x1x1xf32>
      %cst_29 = arith.constant 0.001953125 : f32
      %60 = arith.mulf %59, %cst_29 : f32
      %61 = arith.mulf %55, %55 : vector<8x128xf32>
      %62 = vector.shape_cast %61 : vector<8x128xf32> to vector<1x8x128xf32>
      %cst_30 = arith.constant dense<0.000000e+00> : vector<1xf32>
      %63 = vector.multi_reduction <add>, %62, %cst_30 [1, 2] : vector<1x8x128xf32> to vector<1xf32>
      %64 = vector.shape_cast %63 : vector<1xf32> to vector<1x1x1xf32>
      %65 = vector.extract %64[0, 0, 0] : f32 from vector<1x1x1xf32>
      %cst_31 = arith.constant 0.001953125 : f32
      %66 = arith.mulf %65, %cst_31 : f32
      %67 = arith.mulf %60, %60 : f32
      %68 = arith.subf %66, %67 : f32
      %cst_32 = arith.constant 9.99999997E-7 : f32
      %69 = arith.addf %68, %cst_32 : f32
      %70 = math.rsqrt %69 : f32
      %c0_33 = arith.constant 0 : index
      %71 = memref.load %arg14[%c0_33] : memref<2xf32, #tpu.memory_space<smem>>
      memref.store %60, %arg14[%c0_33] : memref<2xf32, #tpu.memory_space<smem>>
      %c1_34 = arith.constant 1 : index
      %72 = memref.load %arg14[%c1_34] : memref<2xf32, #tpu.memory_space<smem>>
      memref.store %70, %arg14[%c1_34] : memref<2xf32, #tpu.memory_space<smem>>
      %73 = vector.broadcast %60 : f32 to vector<8x128xf32>
      %74 = arith.subf %55, %73 : vector<8x128xf32>
      %75 = vector.broadcast %70 : f32 to vector<8x128xf32>
      %76 = arith.mulf %74, %75 : vector<8x128xf32>
      %77 = arith.truncf %76 : vector<8x128xf32> to vector<8x128xbf16>
      %c0_35 = arith.constant 0 : index
      %c0_36 = arith.constant 0 : index
      %78 = vector.load %arg5[%c0_35, %c0_36] : memref<8x8xbf16, #tpu.memory_space<vmem>>, vector<8x8xbf16>
      %cst_37 = arith.constant dense<0.000000e+00> : vector<8x128xf32>
      %79 = tpu.matmul %78, %77, %cst_37 {dimension_numbers = #tpu.dot_dimension_numbers<[1], [0], [0], [1], [0, 0, 1, 1], [], []>} : vector<8x8xbf16>, vector<8x128xbf16>, vector<8x128xf32> -> vector<8x128xf32>
      %c0_38 = arith.constant 0 : index
      %c0_39 = arith.constant 0 : index
      %80 = vector.load %arg6[%c0_38, %c0_39] : memref<8x1xf32, #tpu.memory_space<vmem>>, vector<8x1xf32>
      %81 = vector.broadcast %80 : vector<8x1xf32> to vector<8x128xf32>
      %82 = arith.addf %79, %81 : vector<8x128xf32>
      %83 = arith.truncf %82 : vector<8x128xf32> to vector<8x128xbf16>
      %c0_40 = arith.constant 0 : index
      %c0_41 = arith.constant 0 : index
      %84 = vector.load %arg12[%c0_40, %c0_41] : memref<8x128xbf16, #tpu.memory_space<vmem>>, vector<8x128xbf16>
      tpu.vector_store %arg12[%c0_40, %c0_41], %83 {strides = array<i32>} : memref<8x128xbf16, #tpu.memory_space<vmem>>, vector<8x128xbf16>,
      %c0_42 = arith.constant 0 : index
      %c0_43 = arith.constant 0 : index
      %85 = vector.load %arg7[%c0_42, %c0_43] : memref<8x8xbf16, #tpu.memory_space<vmem>>, vector<8x8xbf16>
      %cst_44 = arith.constant dense<0.000000e+00> : vector<8x128xf32>
      %86 = tpu.matmul %85, %77, %cst_44 {dimension_numbers = #tpu.dot_dimension_numbers<[1], [0], [0], [1], [0, 0, 1, 1], [], []>} : vector<8x8xbf16>, vector<8x128xbf16>, vector<8x128xf32> -> vector<8x128xf32>
      %c0_45 = arith.constant 0 : index
      %c0_46 = arith.constant 0 : index
      %87 = vector.load %arg8[%c0_45, %c0_46] : memref<8x1xf32, #tpu.memory_space<vmem>>, vector<8x1xf32>
      %88 = vector.broadcast %87 : vector<8x1xf32> to vector<8x128xf32>
      %89 = arith.addf %86, %88 : vector<8x128xf32>
      %90 = arith.truncf %89 : vector<8x128xf32> to vector<8x128xbf16>
      %c0_47 = arith.constant 0 : index
      %c0_48 = arith.constant 0 : index
      %91 = vector.load %arg13[%c0_47, %c0_48] : memref<8x128xbf16, #tpu.memory_space<vmem>>, vector<8x128xbf16>
      tpu.vector_store %arg13[%c0_47, %c0_48], %90 {strides = array<i32>} : memref<8x128xbf16, #tpu.memory_space<vmem>>, vector<8x128xbf16>,
    } else {
    }
    %c0 = arith.constant 0 : index
    %3 = memref.load %arg14[%c0] : memref<2xf32, #tpu.memory_space<smem>>
    %c1 = arith.constant 1 : index
    %4 = memref.load %arg14[%c1] : memref<2xf32, #tpu.memory_space<smem>>
    %c128_i32 = arith.constant 128 : i32
    %5 = arith.muli %arg1, %c128_i32 : i32
    %6 = tpu.assume_multiple %5, 128 : i32
    %c0_1 = arith.constant 0 : index
    %c0_2 = arith.constant 0 : index
    %7 = arith.index_cast %6 : i32 to index
    %8 = vector.load %arg2[%c0_1, %c0_2, %7] : memref<1x8x128xf32, #tpu.memory_space<vmem>>, vector<1x8x128xf32>
    %9 = vector.shape_cast %8 : vector<1x8x128xf32> to vector<8x128xf32>
    %10 = vector.broadcast %3 : f32 to vector<8x128xf32>
    %11 = arith.subf %9, %10 : vector<8x128xf32>
    %12 = vector.broadcast %4 : f32 to vector<8x128xf32>
    %13 = arith.mulf %11, %12 : vector<8x128xf32>
    %14 = arith.truncf %13 : vector<8x128xf32> to vector<8x128xbf16>
    %c0_3 = arith.constant 0 : index
    %c0_4 = arith.constant 0 : index
    %15 = vector.load %arg3[%c0_3, %c0_4] : memref<8x8xbf16, #tpu.memory_space<vmem>>, vector<8x8xbf16>
    %cst = arith.constant dense<0.000000e+00> : vector<8x128xf32>
    %16 = tpu.matmul %15, %14, %cst {dimension_numbers = #tpu.dot_dimension_numbers<[1], [0], [0], [1], [0, 0, 1, 1], [], []>} : vector<8x8xbf16>, vector<8x128xbf16>, vector<8x128xf32> -> vector<8x128xf32>
    %c0_5 = arith.constant 0 : index
    %c0_6 = arith.constant 0 : index
    %17 = vector.load %arg4[%c0_5, %c0_6] : memref<8x1xf32, #tpu.memory_space<vmem>>, vector<8x1xf32>
    %18 = vector.broadcast %17 : vector<8x1xf32> to vector<8x128xf32>
    %19 = arith.addf %16, %18 : vector<8x128xf32>
    %20 = arith.truncf %19 : vector<8x128xf32> to vector<8x128xbf16>
    %c0_7 = arith.constant 0 : index
    %c0_8 = arith.constant 0 : index
    %21 = vector.load %arg12[%c0_7, %c0_8] : memref<8x128xbf16, #tpu.memory_space<vmem>>, vector<8x128xbf16>
    %cst_9 = arith.constant dense<0.000000e+00> : vector<128x128xf32>
    %22 = tpu.matmul %20, %21, %cst_9 {dimension_numbers = #tpu.dot_dimension_numbers<[0], [0], [1], [1], [0, 1, 1, 1], [], []>} : vector<8x128xbf16>, vector<8x128xbf16>, vector<128x128xf32> -> vector<128x128xf32>
    %23 = tpu.iota {dimensions = array<i32: 1>} : vector<1x128xi32>
    %c64_i32 = arith.constant 64 : i32
    %24 = vector.broadcast %c64_i32 : i32 to vector<1x128xi32>
    %25 = arith.cmpi slt, %23, %24 : vector<1x128xi32>
    %cst_10 = arith.constant 0.000000e+00 : f32
    %cst_11 = arith.constant -1.000000e+30 : f32
    %26 = vector.broadcast %cst_10 : f32 to vector<1x128xf32>
    %27 = vector.broadcast %cst_11 : f32 to vector<1x128xf32>
    %28 = arith.select %25, %26, %27 : vector<1x128xi1>, vector<1x128xf32>
    %29 = vector.broadcast %28 : vector<1x128xf32> to vector<128x128xf32>
    %30 = arith.addf %22, %29 : vector<128x128xf32>
    %cst_12 = arith.constant dense<0xFF800000> : vector<128xf32>
    %31 = vector.multi_reduction <maximumf>, %30, %cst_12 [1] : vector<128x128xf32> to vector<128xf32>
    %32 = vector.shape_cast %31 : vector<128xf32> to vector<128x1xf32>
    %33 = vector.broadcast %32 : vector<128x1xf32> to vector<128x128xf32>
    %34 = arith.subf %30, %33 : vector<128x128xf32>
    %35 = math.exp %34 : vector<128x128xf32>
    %cst_13 = arith.constant dense<0.000000e+00> : vector<128xf32>
    %36 = vector.multi_reduction <add>, %35, %cst_13 [1] : vector<128x128xf32> to vector<128xf32>
    %37 = vector.shape_cast %36 : vector<128xf32> to vector<128x1xf32>
    %38 = tpu.reciprocal %37 {approx = true} : vector<128x1xf32> -> vector<128x1xf32>
    %39 = vector.broadcast %38 : vector<128x1xf32> to vector<128x128xf32>
    %40 = arith.mulf %35, %39 : vector<128x128xf32>
    %c0_14 = arith.constant 0 : index
    %c0_15 = arith.constant 0 : index
    %41 = vector.load %arg13[%c0_14, %c0_15] : memref<8x128xbf16, #tpu.memory_space<vmem>>, vector<8x128xbf16>
    %42 = arith.truncf %40 : vector<128x128xf32> to vector<128x128xbf16>
    %cst_16 = arith.constant dense<0.000000e+00> : vector<8x128xf32>
    %43 = tpu.matmul %41, %42, %cst_16 {dimension_numbers = #tpu.dot_dimension_numbers<[1], [1], [0], [0], [0, 0, 1, 0], [], []>} : vector<8x128xbf16>, vector<128x128xbf16>, vector<8x128xf32> -> vector<8x128xf32>
    %c0_17 = arith.constant 0 : index
    %c0_18 = arith.constant 0 : index
    %44 = vector.load %arg9[%c0_17, %c0_18] : memref<8x8xbf16, #tpu.memory_space<vmem>>, vector<8x8xbf16>
    %45 = arith.truncf %43 : vector<8x128xf32> to vector<8x128xbf16>
    %cst_19 = arith.constant dense<0.000000e+00> : vector<8x128xf32>
    %46 = tpu.matmul %44, %45, %cst_19 {dimension_numbers = #tpu.dot_dimension_numbers<[1], [0], [0], [1], [0, 0, 1, 1], [], []>} : vector<8x8xbf16>, vector<8x128xbf16>, vector<8x128xf32> -> vector<8x128xf32>
    %c0_20 = arith.constant 0 : index
    %c0_21 = arith.constant 0 : index
    %47 = vector.load %arg10[%c0_20, %c0_21] : memref<8x1xf32, #tpu.memory_space<vmem>>, vector<8x1xf32>
    %48 = vector.broadcast %47 : vector<8x1xf32> to vector<8x128xf32>
    %49 = arith.addf %46, %48 : vector<8x128xf32>
    %50 = arith.addf %9, %49 : vector<8x128xf32>
    %c0_22 = arith.constant 0 : index
    %c0_23 = arith.constant 0 : index
    %c0_24 = arith.constant 0 : index
    %51 = vector.load %arg11[%c0_22, %c0_23, %c0_24] : memref<1x8x128xf32, #tpu.memory_space<vmem>>, vector<1x8x128xf32>
    %52 = vector.shape_cast %51 : vector<1x8x128xf32> to vector<8x128xf32>
    %53 = vector.shape_cast %50 : vector<8x128xf32> to vector<1x8x128xf32>
    tpu.vector_store %arg11[%c0_22, %c0_23, %c0_24], %53 {strides = array<i32>} : memref<1x8x128xf32, #tpu.memory_space<vmem>>, vector<1x8x128xf32>,
    return
  }
  func.func @transform_0(%arg0: i32, %arg1: i32) -> (i32, i32, i32) {
    %c0_i32 = arith.constant 0 : i32
    %c0_i32_0 = arith.constant 0 : i32
    %c0_i32_1 = arith.constant 0 : i32
    return %arg0, %c0_i32, %c0_i32_0 : i32, i32, i32
  }
  func.func @transform_1(%arg0: i32, %arg1: i32) -> (i32, i32) {
    %c0_i32 = arith.constant 0 : i32
    %c0_i32_0 = arith.constant 0 : i32
    %c0_i32_1 = arith.constant 0 : i32
    return %c0_i32, %c0_i32_0 : i32, i32
  }
  func.func @transform_2(%arg0: i32, %arg1: i32) -> (i32, i32) {
    %c0_i32 = arith.constant 0 : i32
    %c0_i32_0 = arith.constant 0 : i32
    %c0_i32_1 = arith.constant 0 : i32
    return %c0_i32, %c0_i32_0 : i32, i32
  }
  func.func @transform_3(%arg0: i32, %arg1: i32) -> (i32, i32) {
    %c0_i32 = arith.constant 0 : i32
    %c0_i32_0 = arith.constant 0 : i32
    %c0_i32_1 = arith.constant 0 : i32
    return %c0_i32, %c0_i32_0 : i32, i32
  }
  func.func @transform_4(%arg0: i32, %arg1: i32) -> (i32, i32) {
    %c0_i32 = arith.constant 0 : i32
    %c0_i32_0 = arith.constant 0 : i32
    %c0_i32_1 = arith.constant 0 : i32
    return %c0_i32, %c0_i32_0 : i32, i32
  }
  func.func @transform_5(%arg0: i32, %arg1: i32) -> (i32, i32) {
    %c0_i32 = arith.constant 0 : i32
    %c0_i32_0 = arith.constant 0 : i32
    %c0_i32_1 = arith.constant 0 : i32
    return %c0_i32, %c0_i32_0 : i32, i32
  }
  func.func @transform_6(%arg0: i32, %arg1: i32) -> (i32, i32) {
    %c0_i32 = arith.constant 0 : i32
    %c0_i32_0 = arith.constant 0 : i32
    %c0_i32_1 = arith.constant 0 : i32
    return %c0_i32, %c0_i32_0 : i32, i32
  }
  func.func @transform_7(%arg0: i32, %arg1: i32) -> (i32, i32) {
    %c0_i32 = arith.constant 0 : i32
    %c0_i32_0 = arith.constant 0 : i32
    %c0_i32_1 = arith.constant 0 : i32
    return %c0_i32, %c0_i32_0 : i32, i32
  }
  func.func @transform_8(%arg0: i32, %arg1: i32) -> (i32, i32) {
    %c0_i32 = arith.constant 0 : i32
    %c0_i32_0 = arith.constant 0 : i32
    %c0_i32_1 = arith.constant 0 : i32
    return %c0_i32, %c0_i32_0 : i32, i32
  }
  func.func @transform_9(%arg0: i32, %arg1: i32) -> (i32, i32, i32) {
    %c0_i32 = arith.constant 0 : i32
    %c0_i32_0 = arith.constant 0 : i32
    return %arg0, %c0_i32, %arg1 : i32, i32, i32
  }
}

</mosaic_0001>

<llo_original>
// kernel: tpu_custom_call.1
$region0: #{tpu_custom_call.1}
  #allocation0 [shape = 'u32[]', space=smem, size = 0x4, offset = 0x4, fixed_abs, tag = 'smem constant byte address 0x4 - core index']
  #allocation1 [shape = 'u32[144,128]{1,0:T(1,128)}', space=vmem, size = 0x12000, scoped, tag = 'internal scratch']
  #allocation2 [shape = 'bf16[8,128]{1,0:T(8,128)(2,1)}', space=vmem, size = 0x800, scoped, tag = 'scratch operand']
  #allocation3 [shape = 'bf16[8,128]{1,0:T(8,128)(2,1)}', space=vmem, size = 0x800, scoped, tag = 'scratch operand']
  #allocation4 [shape = 'f32[2]{0:T(128)}', space=smem, size = 0x200, scoped, tag = 'scratch operand']
  %s0 = inlined_call_operand.vmem [shape: f32[2,8,128], index: 0, kind: input, shape index: {}]
  %s1 = inlined_call_operand.vmem [shape: bf16[8,8], index: 1, kind: input, shape index: {}]
  %s2 = inlined_call_operand.vmem [shape: f32[8,1], index: 2, kind: input, shape index: {}]
  %s3 = inlined_call_operand.vmem [shape: bf16[8,8], index: 3, kind: input, shape index: {}]
  %s4 = inlined_call_operand.vmem [shape: f32[8,1], index: 4, kind: input, shape index: {}]
  %s5 = inlined_call_operand.vmem [shape: bf16[8,8], index: 5, kind: input, shape index: {}]
  %s6 = inlined_call_operand.vmem [shape: f32[8,1], index: 6, kind: input, shape index: {}]
  %s7 = inlined_call_operand.vmem [shape: bf16[8,8], index: 7, kind: input, shape index: {}]
  %s8 = inlined_call_operand.vmem [shape: f32[8,1], index: 8, kind: input, shape index: {}]
  %s9 = inlined_call_operand.hbm [shape: f32[2,8,128], index: 9, kind: output, shape index: {}]
  %s10 = sld [smem:[#allocation0]]
  $region73: #{tpu_custom_call.1} parent=0
    _
  %s12 = ssub.s32 1, %s10
  %s13 = scalar_select 0, %s12, %s10
  $region1: #{tpu_custom_call.1} parent=0
    #allocation5 [shape = 'u8[8192]{0}', space=vmem, size = 0x2000, scoped, tag = 'output window, operand 0']
    #allocation6 [shape = 's32[2]{0}', space=sflag, size = 0x8, scoped, tag = 'scoped memory for tpu_custom_call.1']
    %14 = vsyncpa [#allocation6], 0
    %s15 = scalar_lea.sflag [#allocation6], 1
    %16 = vsyncpa %s15, 0
    loop: start=0, step=1, limit=4
    $region2: #{tpu_custom_call.1} parent=1 // loop_pre_header
      _
    $region3: #{tpu_custom_call.1} parent=1 // loop_header
      %s18 = sphi 0, %s22
      %p19 = scmp.ge.s32.totalorder %s18, 4
      %s25 = sphi 0, %s37
      %s26 = sphi 0, %s33
      %s27 = sphi 0, %s25
      %s28 = sphi 0, %s26
      %s29 = sphi 0, %s27
      %s30 = sphi 0, %s28
      %s40 = sphi 0, %s42
      %s43 = sphi 0, %s40
      %s44 = sphi 0, %s43
      %s60 = sphi 0, %s44
      %s64 = sphi 0, %s64
      %s66 = sphi 0, %s64
      %s67 = sphi 0, %s66
      %s81 = sphi 0, %s67
      %s85 = sphi 0, %s85
      %s87 = sphi 0, %s85
      %s88 = sphi 0, %s87
      %s102 = sphi 0, %s88
      %s106 = sphi 0, %s106
      %s108 = sphi 0, %s106
      %s109 = sphi 0, %s108
      %s123 = sphi 0, %s109
      %s127 = sphi 0, %s127
      %s129 = sphi 0, %s127
      %s130 = sphi 0, %s129
      %s144 = sphi 0, %s130
      %s148 = sphi 0, %s148
      %s150 = sphi 0, %s148
      %s151 = sphi 0, %s150
      %s165 = sphi 0, %s151
      %s169 = sphi 0, %s169
      %s171 = sphi 0, %s169
      %s172 = sphi 0, %s171
      %s186 = sphi 0, %s172
      %s190 = sphi 0, %s190
      %s192 = sphi 0, %s190
      %s193 = sphi 0, %s192
      %s207 = sphi 0, %s193
      %s211 = sphi 0, %s211
      %s213 = sphi 0, %s211
      %s214 = sphi 0, %s213
      %s228 = sphi 0, %s214
      %s236 = sphi 0, %s238
      %s239 = sphi 0, %s236
      %s240 = sphi 0, %s239
      %s256 = sphi 0, %s240
    $region4: #{tpu_custom_call.1} parent=1 // loop_header_branch
      %21 = sbr.rel (%p19) target = $region8
    $region5: #{tpu_custom_call.1} parent=1 // loop_body
      %s23 = ssub.s32 %s18, 1
      %s24 = ssub.s32 %s18, 2
      %s31 = sadd.s32 1, %s26
      %p32 = scmp.ge.s32.totalorder %s31, 1
      %s33 = scalar_select %p32, 0, %s31
      %s34 = sadd.s32 1, %s25
      %s35 = scalar_select %p32, %s34, %s25
      %p36 = scmp.ge.s32.totalorder %s35, 2
      %s37 = scalar_select %p36, 0, %s35
      %s38 = ssub.s32 %s25, %s37
      %p39 = scmp.eq.s32.totalorder %s38, 0
      %s41 = sadd.s32 %s40, 1
      %s42 = scalar_select %p39, %s40, %s41
      %p45 = pneg %p39
      %p46 = scmp.eq.s32.totalorder %s18, 1
      %p47 = por %p45, %p46
      %p48 = scmp.ne.s32.totalorder %s40, %s43
      %p49 = scmp.eq.s32.totalorder %s18, 0
      %p50 = por %p48, %p49
      %p51 = scmp.ne.s32.totalorder %s40, %s43
      %p52 = scmp.eq.s32.totalorder %s23, 1
      %p53 = por %p51, %p52
      %p54 = scmp.ne.s32.totalorder %s43, %s44
      %p55 = scmp.eq.s32.totalorder %s23, 0
      %p56 = por %p54, %p55
      %p57 = scmp.ne.s32.totalorder %s43, %s44
      %p58 = scmp.eq.s32.totalorder %s24, 1
      %p59 = por %p57, %p58
      %p61 = scmp.ne.s32.totalorder %s44, %s60
      %p62 = scmp.eq.s32.totalorder %s24, 0
      %p63 = por %p61, %p62
      %s65 = sadd.s32 %s64, 1
      %p68 = scmp.eq.s32.totalorder %s18, 1
      %p69 = scmp.ne.s32.totalorder %s64, %s66
      %p70 = scmp.eq.s32.totalorder %s18, 0
      %p71 = por %p69, %p70
      %p72 = scmp.ne.s32.totalorder %s64, %s66
      %p73 = scmp.eq.s32.totalorder %s23, 1
      %p74 = por %p72, %p73
      %p75 = scmp.ne.s32.totalorder %s66, %s67
      %p76 = scmp.eq.s32.totalorder %s23, 0
      %p77 = por %p75, %p76
      %p78 = scmp.ne.s32.totalorder %s66, %s67
      %p79 = scmp.eq.s32.totalorder %s24, 1
      %p80 = por %p78, %p79
      %p82 = scmp.ne.s32.totalorder %s67, %s81
      %p83 = scmp.eq.s32.totalorder %s24, 0
      %p84 = por %p82, %p83
      %s86 = sadd.s32 %s85, 1
      %p89 = scmp.eq.s32.totalorder %s18, 1
      %p90 = scmp.ne.s32.totalorder %s85, %s87
      %p91 = scmp.eq.s32.totalorder %s18, 0
      %p92 = por %p90, %p91
      %p93 = scmp.ne.s32.totalorder %s85, %s87
      %p94 = scmp.eq.s32.totalorder %s23, 1
      %p95 = por %p93, %p94
      %p96 = scmp.ne.s32.totalorder %s87, %s88
      %p97 = scmp.eq.s32.totalorder %s23, 0
      %p98 = por %p96, %p97
      %p99 = scmp.ne.s32.totalorder %s87, %s88
      %p100 = scmp.eq.s32.totalorder %s24, 1
      %p101 = por %p99, %p100
      %p103 = scmp.ne.s32.totalorder %s88, %s102
      %p104 = scmp.eq.s32.totalorder %s24, 0
      %p105 = por %p103, %p104
      %s107 = sadd.s32 %s106, 1
      %p110 = scmp.eq.s32.totalorder %s18, 1
      %p111 = scmp.ne.s32.totalorder %s106, %s108
      %p112 = scmp.eq.s32.totalorder %s18, 0
      %p113 = por %p111, %p112
      %p114 = scmp.ne.s32.totalorder %s106, %s108
      %p115 = scmp.eq.s32.totalorder %s23, 1
      %p116 = por %p114, %p115
      %p117 = scmp.ne.s32.totalorder %s108, %s109
      %p118 = scmp.eq.s32.totalorder %s23, 0
      %p119 = por %p117, %p118
      %p120 = scmp.ne.s32.totalorder %s108, %s109
      %p121 = scmp.eq.s32.totalorder %s24, 1
      %p122 = por %p120, %p121
      %p124 = scmp.ne.s32.totalorder %s109, %s123
      %p125 = scmp.eq.s32.totalorder %s24, 0
      %p126 = por %p124, %p125
      %s128 = sadd.s32 %s127, 1
      %p131 = scmp.eq.s32.totalorder %s18, 1
      %p132 = scmp.ne.s32.totalorder %s127, %s129
      %p133 = scmp.eq.s32.totalorder %s18, 0
      %p134 = por %p132, %p133
      %p135 = scmp.ne.s32.totalorder %s127, %s129
      %p136 = scmp.eq.s32.totalorder %s23, 1
      %p137 = por %p135, %p136
      %p138 = scmp.ne.s32.totalorder %s129, %s130
      %p139 = scmp.eq.s32.totalorder %s23, 0
      %p140 = por %p138, %p139
      %p141 = scmp.ne.s32.totalorder %s129, %s130
      %p142 = scmp.eq.s32.totalorder %s24, 1
      %p143 = por %p141, %p142
      %p145 = scmp.ne.s32.totalorder %s130, %s144
      %p146 = scmp.eq.s32.totalorder %s24, 0
      %p147 = por %p145, %p146
      %s149 = sadd.s32 %s148, 1
      %p152 = scmp.eq.s32.totalorder %s18, 1
      %p153 = scmp.ne.s32.totalorder %s148, %s150
      %p154 = scmp.eq.s32.totalorder %s18, 0
      %p155 = por %p153, %p154
      %p156 = scmp.ne.s32.totalorder %s148, %s150
      %p157 = scmp.eq.s32.totalorder %s23, 1
      %p158 = por %p156, %p157
      %p159 = scmp.ne.s32.totalorder %s150, %s151
      %p160 = scmp.eq.s32.totalorder %s23, 0
      %p161 = por %p159, %p160
      %p162 = scmp.ne.s32.totalorder %s150, %s151
      %p163 = scmp.eq.s32.totalorder %s24, 1
      %p164 = por %p162, %p163
      %p166 = scmp.ne.s32.totalorder %s151, %s165
      %p167 = scmp.eq.s32.totalorder %s24, 0
      %p168 = por %p166, %p167
      %s170 = sadd.s32 %s169, 1
      %p173 = scmp.eq.s32.totalorder %s18, 1
      %p174 = scmp.ne.s32.totalorder %s169, %s171
      %p175 = scmp.eq.s32.totalorder %s18, 0
      %p176 = por %p174, %p175
      %p177 = scmp.ne.s32.totalorder %s169, %s171
      %p178 = scmp.eq.s32.totalorder %s23, 1
      %p179 = por %p177, %p178
      %p180 = scmp.ne.s32.totalorder %s171, %s172
      %p181 = scmp.eq.s32.totalorder %s23, 0
      %p182 = por %p180, %p181
      %p183 = scmp.ne.s32.totalorder %s171, %s172
      %p184 = scmp.eq.s32.totalorder %s24, 1
      %p185 = por %p183, %p184
      %p187 = scmp.ne.s32.totalorder %s172, %s186
      %p188 = scmp.eq.s32.totalorder %s24, 0
      %p189 = por %p187, %p188
      %s191 = sadd.s32 %s190, 1
      %p194 = scmp.eq.s32.totalorder %s18, 1
      %p195 = scmp.ne.s32.totalorder %s190, %s192
      %p196 = scmp.eq.s32.totalorder %s18, 0
      %p197 = por %p195, %p196
      %p198 = scmp.ne.s32.totalorder %s190, %s192
      %p199 = scmp.eq.s32.totalorder %s23, 1
      %p200 = por %p198, %p199
      %p201 = scmp.ne.s32.totalorder %s192, %s193
      %p202 = scmp.eq.s32.totalorder %s23, 0
      %p203 = por %p201, %p202
      %p204 = scmp.ne.s32.totalorder %s192, %s193
      %p205 = scmp.eq.s32.totalorder %s24, 1
      %p206 = por %p204, %p205
      %p208 = scmp.ne.s32.totalorder %s193, %s207
      %p209 = scmp.eq.s32.totalorder %s24, 0
      %p210 = por %p208, %p209
      %s212 = sadd.s32 %s211, 1
      %p215 = scmp.eq.s32.totalorder %s18, 1
      %p216 = scmp.ne.s32.totalorder %s211, %s213
      %p217 = scmp.eq.s32.totalorder %s18, 0
      %p218 = por %p216, %p217
      %p219 = scmp.ne.s32.totalorder %s211, %s213
      %p220 = scmp.eq.s32.totalorder %s23, 1
      %p221 = por %p219, %p220
      %p222 = scmp.ne.s32.totalorder %s213, %s214
      %p223 = scmp.eq.s32.totalorder %s23, 0
      %p224 = por %p222, %p223
      %p225 = scmp.ne.s32.totalorder %s213, %s214
      %p226 = scmp.eq.s32.totalorder %s24, 1
      %p227 = por %p225, %p226
      %p229 = scmp.ne.s32.totalorder %s214, %s228
      %p230 = scmp.eq.s32.totalorder %s24, 0
      %p231 = por %p229, %p230
      %s232 = ssub.s32 %s25, %s37
      %s233 = ssub.s32 %s26, %s33
      %s234 = sor.u32 %s232, %s233
      %p235 = scmp.eq.s32.totalorder %s234, 0
      %s237 = sadd.s32 %s236, 1
      %s238 = scalar_select %p235, %s236, %s237
      %p241 = pneg %p235
      %p242 = scmp.eq.s32.totalorder %s18, 1
      %p243 = por %p241, %p242
      %p244 = scmp.ne.s32.totalorder %s236, %s239
      %p245 = scmp.eq.s32.totalorder %s18, 0
      %p246 = por %p244, %p245
      %p247 = scmp.ne.s32.totalorder %s236, %s239
      %p248 = scmp.eq.s32.totalorder %s23, 1
      %p249 = por %p247, %p248
      %p250 = scmp.ne.s32.totalorder %s239, %s240
      %p251 = scmp.eq.s32.totalorder %s23, 0
      %p252 = por %p250, %p251
      %p253 = scmp.ne.s32.totalorder %s239, %s240
      %p254 = scmp.eq.s32.totalorder %s24, 1
      %p255 = por %p253, %p254
      %p257 = scmp.ne.s32.totalorder %s240, %s256
      %p258 = scmp.eq.s32.totalorder %s24, 0
      %p259 = por %p257, %p258
      %p260 = scmp.le.s32.totalorder 1, %s18
      %p261 = scmp.lt.s32.totalorder %s18, 3
      %p262 = pnand %p260, %p261
      %p263 = pneg %p262
      // Predicated region
      $region9: #{tpu_custom_call.1} parent=5 // pred_check
        _
      $region10: #{tpu_custom_call.1} parent=5 // pred_check_branch
        %265 = sbr.rel (%p262) target = $region12
      $region11: #{tpu_custom_call.1} parent=5 // pred_region
        %s266 = ssub.s32 %s18, 1
        // Predicated region
        $region13: #{tpu_custom_call.1} parent=11 // pred_check
          %p267 = pneg %p77
        $region14: #{tpu_custom_call.1} parent=11 // pred_check_branch
          %269 = sbr.rel (%p267) target = $region16
        $region15: #{tpu_custom_call.1} parent=11 // pred_region
          _
        $region16: #{tpu_custom_call.1} parent=11 // pred_fallthru
          _
        // Predicated region
        $region17: #{tpu_custom_call.1} parent=11 // pred_check
          %p270 = pneg %p98
        $region18: #{tpu_custom_call.1} parent=11 // pred_check_branch
          %272 = sbr.rel (%p270) target = $region20
        $region19: #{tpu_custom_call.1} parent=11 // pred_region
          _
        $region20: #{tpu_custom_call.1} parent=11 // pred_fallthru
          _
        // Predicated region
        $region21: #{tpu_custom_call.1} parent=11 // pred_check
          %p273 = pneg %p119
        $region22: #{tpu_custom_call.1} parent=11 // pred_check_branch
          %275 = sbr.rel (%p273) target = $region24
        $region23: #{tpu_custom_call.1} parent=11 // pred_region
          _
        $region24: #{tpu_custom_call.1} parent=11 // pred_fallthru
          _
        // Predicated region
        $region25: #{tpu_custom_call.1} parent=11 // pred_check
          %p276 = pneg %p140
        $region26: #{tpu_custom_call.1} parent=11 // pred_check_branch
          %278 = sbr.rel (%p276) target = $region28
        $region27: #{tpu_custom_call.1} parent=11 // pred_region
          _
        $region28: #{tpu_custom_call.1} parent=11 // pred_fallthru
          _
        // Predicated region
        $region29: #{tpu_custom_call.1} parent=11 // pred_check
          %p279 = pneg %p161
        $region30: #{tpu_custom_call.1} parent=11 // pred_check_branch
          %281 = sbr.rel (%p279) target = $region32
        $region31: #{tpu_custom_call.1} parent=11 // pred_region
          _
        $region32: #{tpu_custom_call.1} parent=11 // pred_fallthru
          _
        // Predicated region
        $region33: #{tpu_custom_call.1} parent=11 // pred_check
          %p282 = pneg %p182
        $region34: #{tpu_custom_call.1} parent=11 // pred_check_branch
          %284 = sbr.rel (%p282) target = $region36
        $region35: #{tpu_custom_call.1} parent=11 // pred_region
          _
        $region36: #{tpu_custom_call.1} parent=11 // pred_fallthru
          _
        // Predicated region
        $region37: #{tpu_custom_call.1} parent=11 // pred_check
          %p285 = pneg %p203
        $region38: #{tpu_custom_call.1} parent=11 // pred_check_branch
          %287 = sbr.rel (%p285) target = $region40
        $region39: #{tpu_custom_call.1} parent=11 // pred_region
          _
        $region40: #{tpu_custom_call.1} parent=11 // pred_fallthru
          _
        // Predicated region
        $region41: #{tpu_custom_call.1} parent=11 // pred_check
          %p288 = pneg %p224
        $region42: #{tpu_custom_call.1} parent=11 // pred_check_branch
          %290 = sbr.rel (%p288) target = $region44
        $region43: #{tpu_custom_call.1} parent=11 // pred_region
          _
        $region44: #{tpu_custom_call.1} parent=11 // pred_fallthru
          _
      $region12: #{tpu_custom_call.1} parent=5 // pred_fallthru
        _
      %p291 = scmp.lt.s32.totalorder %s18, 2
      // Predicated region
      $region45: #{tpu_custom_call.1} parent=5 // pred_check
        %p292 = pneg %p291
      $region46: #{tpu_custom_call.1} parent=5 // pred_check_branch
        %294 = sbr.rel (%p292) target = $region48
      $region47: #{tpu_custom_call.1} parent=5 // pred_region
        // Predicated region
        $region49: #{tpu_custom_call.1} parent=47 // pred_check
          %p295 = pneg %p50
        $region50: #{tpu_custom_call.1} parent=47 // pred_check_branch
          %297 = sbr.rel (%p295) target = $region52
        $region51: #{tpu_custom_call.1} parent=47 // pred_region
          %p298 = scmp.lt.s32.totalorder %s25, 1
          %s299 = scalar_select %p298, %s25, 1
          %s300 = smul.addr %s299, 8
          %s301 = scalar_lea.vmem %s0, %s300
        $region52: #{tpu_custom_call.1} parent=47 // pred_fallthru
          _
      $region48: #{tpu_custom_call.1} parent=5 // pred_fallthru
        _
      %p302 = scmp.le.s32.totalorder 1, %s18
      %p303 = scmp.lt.s32.totalorder %s18, 3
      %p304 = pnand %p302, %p303
      %p305 = pneg %p304
      // Predicated region
      $region53: #{tpu_custom_call.1} parent=5 // pred_check
        _
      $region54: #{tpu_custom_call.1} parent=5 // pred_check_branch
        %307 = sbr.rel (%p304) target = $region56
      $region55: #{tpu_custom_call.1} parent=5 // pred_region
        %s308 = ssub.s32 %s18, 1
        %p309 = scmp.lt.s32.totalorder %s27, 1
        %s310 = scalar_select %p309, %s27, 1
        %s311 = smul.addr %s310, 8
        %s312 = scalar_lea.vmem %s0, %s311
        %p313 = pneg %p56
        %p314 = pneg %p53
        %p315 = pneg %p77
        %p316 = pneg %p74
        %p317 = pneg %p98
        %p318 = pneg %p95
        %p319 = pneg %p119
        %p320 = pneg %p116
        %p321 = pneg %p140
        %p322 = pneg %p137
        %p323 = pneg %p161
        %p324 = pneg %p158
        %p325 = pneg %p182
        %p326 = pneg %p179
        %p327 = pneg %p203
        %p328 = pneg %p200
        %p329 = pneg %p224
        %p330 = pneg %p221
        %p331 = pneg %p252
        %p332 = pneg %p249
        %s333 = sand.u32 %s239, 1
        %s334 = scalar_lea.sflag [#allocation6], %s333
        %s335 = sand.u32 %s239, 1
        %s336 = smul.addr %s335, 8
        %s337 = scalar_lea.vmem [#allocation5], %s336
        %p338 = scmp.lt.s32.totalorder %s27, 1
        %s339 = scalar_select %p338, %s27, 1
        %s340 = smul.addr %s339, 8
        %s341 = scalar_lea.vmem %s0, %s340
        %p343 = scmp.eq.s32.totalorder %s28, 0
        // Predicated region
        $region57: #{tpu_custom_call.1} parent=55 // pred_check
          %p344 = pneg %p343
        $region58: #{tpu_custom_call.1} parent=55 // pred_check_branch
          %346 = sbr.rel (%p344) target = $region60
        $region59: #{tpu_custom_call.1} parent=55 // pred_region
          %v347 = vld [vmem:[%s341] sm:$0xff]
          %348 = vadd.xlane.f32.xlu0 %v347
          %v349 = vpop.xlane.xlu0 %348
          %v350 = vrot.slane %v349, 4
          %v351 = vadd.f32 %v349, %v350
          %v352 = vrot.slane %v351, 2
          %v353 = vadd.f32 %v351, %v352
          %v354 = vrot.slane %v353, 1
          %v355 = vadd.f32 %v353, %v354
          %s356 = vtos %v355
          %s357 = smul.f32 %s356, 0.001953125
          %v358 = vmul.f32 %v347, %v347
          %359 = vadd.xlane.f32.xlu0 %v358
          %v360 = vpop.xlane.xlu0 %359
          %v361 = vrot.slane %v360, 4
          %v362 = vadd.f32 %v360, %v361
          %v363 = vrot.slane %v362, 2
          %v364 = vadd.f32 %v362, %v363
          %v365 = vrot.slane %v364, 1
          %v366 = vadd.f32 %v364, %v365
          %s367 = vtos %v366
          %s368 = smul.f32 %s367, 0.001953125
          %s369 = smul.f32 %s357, %s357
          %s370 = ssub.f32 %s368, %s369
          %s371 = sadd.f32 %s370, 1e-06
          %v372 = vstv %s371
          %v373 = vrsqrt.pop %v372
          %s374 = vtos %v373
          %s375 = scalar_lea.smem [#allocation4], 0
          %376 = sst [smem:[%s375]] %s357
          %s377 = scalar_lea.smem [#allocation4], 1
          %378 = sst [smem:[%s377]] %s374
          %v379 = vstv %s357
          %v380 = vsub.f32 %v347, %v379
          %v381 = vstv %s374
          %v382 = vmul.f32 %v380, %v381
          %v383 = vpack.c.bf16 %v382, %v382
          %v384 = vld [vmem:[%s3] sm:$0xf]
          %v385 = vld [vmem:[%s4] sm:$0xff]
          %387 = vset.pattern.permute.xlu0 0
          %388 = vperm.xlu0 %387, %v385
          %v389 = vpop.permute.xlu0 %388
          %vm391 = vcmask 64512
          %v393 = vsel %vm391, %v384, 0
          %vm395 = vcmask 1043456
          %v397 = vsel %vm395, %v383, 0
          %399 = vmatprep.subr.bf16.mxu0 0
          %400 = vmatpush1.bf16.msra.mxu0 0
          %401 = vmatprep.subr.bf16.mxu0 0
          %402 = vmatpush1.bf16.msra.mxu0 0
          %403 = vmatprep.subr.bf16.mxu0 0
          %404 = vmatpush1.bf16.msra.mxu0 0
          %405 = vmatprep.subr.bf16.mxu0 0
          %406 = vmatpush1.bf16.msra.mxu0 0
          %407 = vmatprep.subr.bf16.mxu0 0
          %408 = vmatpush1.bf16.msra.mxu0 0
          %409 = vmatprep.subr.bf16.mxu0 0
          %410 = vmatpush1.bf16.msra.mxu0 0
          %411 = vmatprep.subr.bf16.mxu0 0
          %412 = vmatpush1.bf16.msra.mxu0 0
          %413 = vmatprep.subr.bf16.mxu0 0
          %414 = vmatpush1.bf16.msra.mxu0 %v397
          %415 = vmatprep.subr.bf16.mxu0 0
          %416 = vmatpush2.bf16.msra.mxu0 0
          %417 = vmatprep.subr.bf16.mxu0 0
          %418 = vmatpush2.bf16.msra.mxu0 0
          %419 = vmatprep.subr.bf16.mxu0 0
          %420 = vmatpush2.bf16.msra.mxu0 0
          %421 = vmatprep.subr.bf16.mxu0 0
          %422 = vmatpush2.bf16.msra.mxu0 0
          %423 = vmatprep.subr.bf16.mxu0 0
          %424 = vmatpush2.bf16.msra.mxu0 0
          %425 = vmatprep.subr.bf16.mxu0 0
          %426 = vmatpush2.bf16.msra.mxu0 0
          %427 = vmatprep.subr.bf16.mxu0 0
          %428 = vmatpush2.bf16.msra.mxu0 0
          %429 = vmatprep.subr.bf16.mxu0 0
          %430 = vmatpush2.bf16.msra.mxu0 0
          %431 = vmatprep.mubr.bf16.mxu0 0
          %432 = vmatmul.mubr.bf16.gmra.mxu0 %v393
          %v433 = vpop.f32.mrf.mxu0
          %v434 = vadd.f32 %v389, %v433
          %v435 = vpop.f32.mrf.mxu0
          %v436 = vpop.f32.mrf.mxu0
          %v437 = vpop.f32.mrf.mxu0
          %438 = vdwg.mxu0
          %v439 = vpack.c.bf16 %v434, %v434
          %440 = vst [vmem:[#allocation2] sm:$0xf] %v439
          %v441 = vld [vmem:[%s5] sm:$0xf]
          %v442 = vld [vmem:[%s6] sm:$0xff]
          %444 = vset.pattern.permute.xlu0 0
          %445 = vperm.xlu0 %444, %v442
          %v446 = vpop.permute.xlu0 %445
          %v449 = vsel %vm391, %v441, 0
          %451 = vmatprep.subr.bf16.mxu0 0
          %452 = vmatpush1.bf16.msra.mxu0 0
          %453 = vmatprep.subr.bf16.mxu0 0
          %454 = vmatpush1.bf16.msra.mxu0 0
          %455 = vmatprep.subr.bf16.mxu0 0
          %456 = vmatpush1.bf16.msra.mxu0 0
          %457 = vmatprep.subr.bf16.mxu0 0
          %458 = vmatpush1.bf16.msra.mxu0 0
          %459 = vmatprep.subr.bf16.mxu0 0
          %460 = vmatpush1.bf16.msra.mxu0 0
          %461 = vmatprep.subr.bf16.mxu0 0
          %462 = vmatpush1.bf16.msra.mxu0 0
          %463 = vmatprep.subr.bf16.mxu0 0
          %464 = vmatpush1.bf16.msra.mxu0 0
          %465 = vmatprep.subr.bf16.mxu0 0
          %466 = vmatpush1.bf16.msra.mxu0 %v397
          %467 = vmatprep.subr.bf16.mxu0 0
          %468 = vmatpush2.bf16.msra.mxu0 0
          %469 = vmatprep.subr.bf16.mxu0 0
          %470 = vmatpush2.bf16.msra.mxu0 0
          %471 = vmatprep.subr.bf16.mxu0 0
          %472 = vmatpush2.bf16.msra.mxu0 0
          %473 = vmatprep.subr.bf16.mxu0 0
          %474 = vmatpush2.bf16.msra.mxu0 0
          %475 = vmatprep.subr.bf16.mxu0 0
          %476 = vmatpush2.bf16.msra.mxu0 0
          %477 = vmatprep.subr.bf16.mxu0 0
          %478 = vmatpush2.bf16.msra.mxu0 0
          %479 = vmatprep.subr.bf16.mxu0 0
          %480 = vmatpush2.bf16.msra.mxu0 0
          %481 = vmatprep.subr.bf16.mxu0 0
          %482 = vmatpush2.bf16.msra.mxu0 0
          %483 = vmatprep.mubr.bf16.mxu0 0
          %484 = vmatmul.mubr.bf16.gmra.mxu0 %v449
          %v485 = vpop.f32.mrf.mxu0
          %v486 = vadd.f32 %v446, %v485
          %v487 = vpop.f32.mrf.mxu0
          %v488 = vpop.f32.mrf.mxu0
          %v489 = vpop.f32.mrf.mxu0
          %490 = vdwg.mxu0
          %v491 = vpack.c.bf16 %v486, %v486
          %492 = vst [vmem:[#allocation3] sm:$0xf] %v491
        $region60: #{tpu_custom_call.1} parent=55 // pred_fallthru
          _
        %s493 = sld [smem:[#allocation4]]
        %s494 = sld [smem:[#allocation4 + $0x1]]
        %s495 = smul.u32 %s28, 128
        %s496 = sshra.s32 %s495, 7
        %s497 = sand.u32 %s495, 127
        %s498 = scalar_lea.vmem %s341, %s496
        %v499 = vld [vmem:[%s498] sm:$0xff]
        %v500 = vstv %s493
        %v501 = vsub.f32 %v499, %v500
        %v502 = vstv %s494
        %v503 = vmul.f32 %v501, %v502
        %v504 = vpack.c.bf16 %v503, %v503
        %v505 = vld [vmem:[%s1] sm:$0xf]
        %v506 = vld [vmem:[%s2] sm:$0xff]
        %508 = vset.pattern.permute.xlu0 0
        %509 = vperm.xlu0 %508, %v506
        %v510 = vpop.permute.xlu0 %509
        %vm512 = vcmask 64512
        %v514 = vsel %vm512, %v505, 0
        %vm516 = vcmask 1043456
        %v518 = vsel %vm516, %v504, 0
        %520 = vmatprep.subr.bf16.mxu0 0
        %521 = vmatpush1.bf16.msra.mxu0 0
        %522 = vmatprep.subr.bf16.mxu0 0
        %523 = vmatpush1.bf16.msra.mxu0 0
        %524 = vmatprep.subr.bf16.mxu0 0
        %525 = vmatpush1.bf16.msra.mxu0 0
        %526 = vmatprep.subr.bf16.mxu0 0
        %527 = vmatpush1.bf16.msra.mxu0 0
        %528 = vmatprep.subr.bf16.mxu0 0
        %529 = vmatpush1.bf16.msra.mxu0 0
        %530 = vmatprep.subr.bf16.mxu0 0
        %531 = vmatpush1.bf16.msra.mxu0 0
        %532 = vmatprep.subr.bf16.mxu0 0
        %533 = vmatpush1.bf16.msra.mxu0 0
        %534 = vmatprep.subr.bf16.mxu0 0
        %535 = vmatpush1.bf16.msra.mxu0 %v518
        %536 = vmatprep.subr.bf16.mxu0 0
        %537 = vmatpush2.bf16.msra.mxu0 0
        %538 = vmatprep.subr.bf16.mxu0 0
        %539 = vmatpush2.bf16.msra.mxu0 0
        %540 = vmatprep.subr.bf16.mxu0 0
        %541 = vmatpush2.bf16.msra.mxu0 0
        %542 = vmatprep.subr.bf16.mxu0 0
        %543 = vmatpush2.bf16.msra.mxu0 0
        %544 = vmatprep.subr.bf16.mxu0 0
        %545 = vmatpush2.bf16.msra.mxu0 0
        %546 = vmatprep.subr.bf16.mxu0 0
        %547 = vmatpush2.bf16.msra.mxu0 0
        %548 = vmatprep.subr.bf16.mxu0 0
        %549 = vmatpush2.bf16.msra.mxu0 0
        %550 = vmatprep.subr.bf16.mxu0 0
        %551 = vmatpush2.bf16.msra.mxu0 0
        %552 = vmatprep.mubr.bf16.mxu0 0
        %553 = vmatmul.mubr.bf16.gmra.mxu0 %v514
        %v554 = vpop.f32.mrf.mxu0
        %v555 = vadd.f32 %v510, %v554
        %v556 = vpop.f32.mrf.mxu0
        %v557 = vpop.f32.mrf.mxu0
        %v558 = vpop.f32.mrf.mxu0
        %559 = vdwg.mxu0
        %v560 = vpack.c.bf16 %v555, %v555
        %v561 = vld [vmem:[#allocation2] sm:$0xf]
        %v562 = vlaneseq
        %v563 = vand.u32 %v562, 127
        %vm564 = vcmp.lt.s32.totalorder %v563, 64
        %v565 = vsel %vm564, 0.0, -1e+30
        %566 = vxpose.xlu0.c.b16.start [1/8] %v560, 128
        %567 = vxpose.xlu0.c.b16.cont [2/8] 0, 128
        %568 = vxpose.xlu0.c.b16.cont [3/8] 0, 128
        %569 = vxpose.xlu0.c.b16.cont [4/8] 0, 128
        %570 = vxpose.xlu0.c.b16.cont [5/8] 0, 128
        %571 = vxpose.xlu0.c.b16.cont [6/8] 0, 128
        %572 = vxpose.xlu0.c.b16.cont [7/8] 0, 128
        %573 = vxpose.xlu0.c.b16.end [8/8] 0, 128
        %v574 = vpop.trf.xlu0
        %v575 = vpop.trf.xlu0
        %v576 = vpop.trf.xlu0
        %v577 = vpop.trf.xlu0
        %v578 = vpop.trf.xlu0
        %v579 = vpop.trf.xlu0
        %v580 = vpop.trf.xlu0
        %v581 = vpop.trf.xlu0
        %v583 = vsel %vm512, %v574, 0
        %v586 = vsel %vm512, %v575, 0
        %v589 = vsel %vm512, %v576, 0
        %v592 = vsel %vm512, %v577, 0
        %v595 = vsel %vm512, %v578, 0
        %v598 = vsel %vm512, %v579, 0
        %v601 = vsel %vm512, %v580, 0
        %v604 = vsel %vm512, %v581, 0
        %v607 = vsel %vm516, %v561, 0
        %609 = vmatprep.subr.bf16.mxu0 0
        %610 = vmatpush1.bf16.msra.mxu0 0
        %611 = vmatprep.subr.bf16.mxu0 0
        %612 = vmatpush1.bf16.msra.mxu0 0
        %613 = vmatprep.subr.bf16.mxu0 0
        %614 = vmatpush1.bf16.msra.mxu0 0
        %615 = vmatprep.subr.bf16.mxu0 0
        %616 = vmatpush1.bf16.msra.mxu0 0
        %617 = vmatprep.subr.bf16.mxu0 0
        %618 = vmatpush1.bf16.msra.mxu0 0
        %619 = vmatprep.subr.bf16.mxu0 0
        %620 = vmatpush1.bf16.msra.mxu0 0
        %621 = vmatprep.subr.bf16.mxu0 0
        %622 = vmatpush1.bf16.msra.mxu0 0
        %623 = vmatprep.subr.bf16.mxu0 0
        %624 = vmatpush1.bf16.msra.mxu0 %v607
        %625 = vmatprep.subr.bf16.mxu0 0
        %626 = vmatpush2.bf16.msra.mxu0 0
        %627 = vmatprep.subr.bf16.mxu0 0
        %628 = vmatpush2.bf16.msra.mxu0 0
        %629 = vmatprep.subr.bf16.mxu0 0
        %630 = vmatpush2.bf16.msra.mxu0 0
        %631 = vmatprep.subr.bf16.mxu0 0
        %632 = vmatpush2.bf16.msra.mxu0 0
        %633 = vmatprep.subr.bf16.mxu0 0
        %634 = vmatpush2.bf16.msra.mxu0 0
        %635 = vmatprep.subr.bf16.mxu0 0
        %636 = vmatpush2.bf16.msra.mxu0 0
        %637 = vmatprep.subr.bf16.mxu0 0
        %638 = vmatpush2.bf16.msra.mxu0 0
        %639 = vmatprep.subr.bf16.mxu0 0
        %640 = vmatpush2.bf16.msra.mxu0 0
        %641 = vmatprep.mubr.bf16.mxu0 0
        %642 = vmatmul.mubr.bf16.gmra.mxu0 %v583
        %v643 = vpop.f32.mrf.mxu0
        %v644 = vadd.f32 %v565, %v643
        %v645 = vpop.f32.mrf.mxu0
        %v646 = vpop.f32.mrf.mxu0
        %v647 = vadd.f32 %v565, %v646
        %v648 = vpop.f32.mrf.mxu0
        %649 = vmatprep.mubr.bf16.mxu0 0
        %650 = vmatmul.mubr.bf16.gmra.mxu0 %v586
        %v651 = vpop.f32.mrf.mxu0
        %v652 = vadd.f32 %v565, %v651
        %v653 = vpop.f32.mrf.mxu0
        %v654 = vpop.f32.mrf.mxu0
        %v655 = vadd.f32 %v565, %v654
        %v656 = vpop.f32.mrf.mxu0
        %657 = vmatprep.mubr.bf16.mxu0 0
        %658 = vmatmul.mubr.bf16.gmra.mxu0 %v589
        %v659 = vpop.f32.mrf.mxu0
        %v660 = vadd.f32 %v565, %v659
        %v661 = vpop.f32.mrf.mxu0
        %v662 = vpop.f32.mrf.mxu0
        %v663 = vadd.f32 %v565, %v662
        %v664 = vpop.f32.mrf.mxu0
        %665 = vmatprep.mubr.bf16.mxu0 0
        %666 = vmatmul.mubr.bf16.gmra.mxu0 %v592
        %v667 = vpop.f32.mrf.mxu0
        %v668 = vadd.f32 %v565, %v667
        %v669 = vpop.f32.mrf.mxu0
        %v670 = vpop.f32.mrf.mxu0
        %v671 = vadd.f32 %v565, %v670
        %v672 = vpop.f32.mrf.mxu0
        %673 = vmatprep.mubr.bf16.mxu0 0
        %674 = vmatmul.mubr.bf16.gmra.mxu0 %v595
        %v675 = vpop.f32.mrf.mxu0
        %v676 = vadd.f32 %v565, %v675
        %v677 = vpop.f32.mrf.mxu0
        %v678 = vpop.f32.mrf.mxu0
        %v679 = vadd.f32 %v565, %v678
        %v680 = vpop.f32.mrf.mxu0
        %681 = vmatprep.mubr.bf16.mxu0 0
        %682 = vmatmul.mubr.bf16.gmra.mxu0 %v598
        %v683 = vpop.f32.mrf.mxu0
        %v684 = vadd.f32 %v565, %v683
        %v685 = vpop.f32.mrf.mxu0
        %v686 = vpop.f32.mrf.mxu0
        %v687 = vadd.f32 %v565, %v686
        %v688 = vpop.f32.mrf.mxu0
        %689 = vmatprep.mubr.bf16.mxu0 0
        %690 = vmatmul.mubr.bf16.gmra.mxu0 %v601
        %v691 = vpop.f32.mrf.mxu0
        %v692 = vadd.f32 %v565, %v691
        %v693 = vpop.f32.mrf.mxu0
        %v694 = vpop.f32.mrf.mxu0
        %v695 = vadd.f32 %v565, %v694
        %v696 = vpop.f32.mrf.mxu0
        %697 = vmatprep.mubr.bf16.mxu0 0
        %698 = vmatmul.mubr.bf16.gmra.mxu0 %v604
        %v699 = vpop.f32.mrf.mxu0
        %v700 = vadd.f32 %v565, %v699
        %v701 = vpop.f32.mrf.mxu0
        %v702 = vpop.f32.mrf.mxu0
        %v703 = vadd.f32 %v565, %v702
        %v704 = vpop.f32.mrf.mxu0
        %705 = vdwg.mxu0
        %706 = vmax.xlane.f32.xlu0 %v644
        %v707 = vpop.xlane.xlu0 %706
        %708 = vmax.xlane.f32.xlu0 %v647
        %v709 = vpop.xlane.xlu0 %708
        %710 = vmax.xlane.f32.xlu0 %v652
        %v711 = vpop.xlane.xlu0 %710
        %712 = vmax.xlane.f32.xlu0 %v655
        %v713 = vpop.xlane.xlu0 %712
        %714 = vmax.xlane.f32.xlu0 %v660
        %v715 = vpop.xlane.xlu0 %714
        %716 = vmax.xlane.f32.xlu0 %v663
        %v717 = vpop.xlane.xlu0 %716
        %718 = vmax.xlane.f32.xlu0 %v668
        %v719 = vpop.xlane.xlu0 %718
        %720 = vmax.xlane.f32.xlu0 %v671
        %v721 = vpop.xlane.xlu0 %720
        %722 = vmax.xlane.f32.xlu0 %v676
        %v723 = vpop.xlane.xlu0 %722
        %724 = vmax.xlane.f32.xlu0 %v679
        %v725 = vpop.xlane.xlu0 %724
        %726 = vmax.xlane.f32.xlu0 %v684
        %v727 = vpop.xlane.xlu0 %726
        %728 = vmax.xlane.f32.xlu0 %v687
        %v729 = vpop.xlane.xlu0 %728
        %730 = vmax.xlane.f32.xlu0 %v692
        %v731 = vpop.xlane.xlu0 %730
        %732 = vmax.xlane.f32.xlu0 %v695
        %v733 = vpop.xlane.xlu0 %732
        %734 = vmax.xlane.f32.xlu0 %v700
        %v735 = vpop.xlane.xlu0 %734
        %736 = vmax.xlane.f32.xlu0 %v703
        %v737 = vpop.xlane.xlu0 %736
        %v738 = vsub.f32 %v644, %v707
        %v739 = vsub.f32 %v647, %v709
        %v740 = vsub.f32 %v652, %v711
        %v741 = vsub.f32 %v655, %v713
        %v742 = vsub.f32 %v660, %v715
        %v743 = vsub.f32 %v663, %v717
        %v744 = vsub.f32 %v668, %v719
        %v745 = vsub.f32 %v671, %v721
        %v746 = vsub.f32 %v676, %v723
        %v747 = vsub.f32 %v679, %v725
        %v748 = vsub.f32 %v684, %v727
        %v749 = vsub.f32 %v687, %v729
        %v750 = vsub.f32 %v692, %v731
        %v751 = vsub.f32 %v695, %v733
        %v752 = vsub.f32 %v700, %v735
        %v753 = vsub.f32 %v703, %v737
        %v754 = vmul.f32 %v738, 1.442695
        %v755 = vpow.pop %v754
        %v756 = vmul.f32 %v739, 1.442695
        %v757 = vpow.pop %v756
        %v758 = vmul.f32 %v740, 1.442695
        %v759 = vpow.pop %v758
        %v760 = vmul.f32 %v741, 1.442695
        %v761 = vpow.pop %v760
        %v762 = vmul.f32 %v742, 1.442695
        %v763 = vpow.pop %v762
        %v764 = vmul.f32 %v743, 1.442695
        %v765 = vpow.pop %v764
        %v766 = vmul.f32 %v744, 1.442695
        %v767 = vpow.pop %v766
        %v768 = vmul.f32 %v745, 1.442695
        %v769 = vpow.pop %v768
        %v770 = vmul.f32 %v746, 1.442695
        %v771 = vpow.pop %v770
        %v772 = vmul.f32 %v747, 1.442695
        %v773 = vpow.pop %v772
        %v774 = vmul.f32 %v748, 1.442695
        %v775 = vpow.pop %v774
        %v776 = vmul.f32 %v749, 1.442695
        %v777 = vpow.pop %v776
        %v778 = vmul.f32 %v750, 1.442695
        %v779 = vpow.pop %v778
        %v780 = vmul.f32 %v751, 1.442695
        %v781 = vpow.pop %v780
        %v782 = vmul.f32 %v752, 1.442695
        %v783 = vpow.pop %v782
        %v784 = vmul.f32 %v753, 1.442695
        %v785 = vpow.pop %v784
        %786 = vadd.xlane.f32.xlu0 %v755
        %v787 = vpop.xlane.xlu0 %786
        %788 = vadd.xlane.f32.xlu0 %v757
        %v789 = vpop.xlane.xlu0 %788
        %790 = vadd.xlane.f32.xlu0 %v759
        %v791 = vpop.xlane.xlu0 %790
        %792 = vadd.xlane.f32.xlu0 %v761
        %v793 = vpop.xlane.xlu0 %792
        %794 = vadd.xlane.f32.xlu0 %v763
        %v795 = vpop.xlane.xlu0 %794
        %796 = vadd.xlane.f32.xlu0 %v765
        %v797 = vpop.xlane.xlu0 %796
        %798 = vadd.xlane.f32.xlu0 %v767
        %v799 = vpop.xlane.xlu0 %798
        %800 = vadd.xlane.f32.xlu0 %v769
        %v801 = vpop.xlane.xlu0 %800
        %802 = vadd.xlane.f32.xlu0 %v771
        %v803 = vpop.xlane.xlu0 %802
        %804 = vadd.xlane.f32.xlu0 %v773
        %v805 = vpop.xlane.xlu0 %804
        %806 = vadd.xlane.f32.xlu0 %v775
        %v807 = vpop.xlane.xlu0 %806
        %808 = vadd.xlane.f32.xlu0 %v777
        %v809 = vpop.xlane.xlu0 %808
        %810 = vadd.xlane.f32.xlu0 %v779
        %v811 = vpop.xlane.xlu0 %810
        %812 = vadd.xlane.f32.xlu0 %v781
        %v813 = vpop.xlane.xlu0 %812
        %814 = vadd.xlane.f32.xlu0 %v783
        %v815 = vpop.xlane.xlu0 %814
        %816 = vadd.xlane.f32.xlu0 %v785
        %v817 = vpop.xlane.xlu0 %816
        %v818 = vrcp.pop %v787
        %v819 = vrcp.pop %v789
        %v820 = vrcp.pop %v791
        %v821 = vrcp.pop %v793
        %v822 = vrcp.pop %v795
        %v823 = vrcp.pop %v797
        %v824 = vrcp.pop %v799
        %v825 = vrcp.pop %v801
        %v826 = vrcp.pop %v803
        %v827 = vrcp.pop %v805
        %v828 = vrcp.pop %v807
        %v829 = vrcp.pop %v809
        %v830 = vrcp.pop %v811
        %v831 = vrcp.pop %v813
        %v832 = vrcp.pop %v815
        %v833 = vrcp.pop %v817
        %v834 = vmul.f32 %v755, %v818
        %v835 = vmul.f32 %v757, %v819
        %v836 = vmul.f32 %v759, %v820
        %v837 = vmul.f32 %v761, %v821
        %v838 = vmul.f32 %v763, %v822
        %v839 = vmul.f32 %v765, %v823
        %v840 = vmul.f32 %v767, %v824
        %v841 = vmul.f32 %v769, %v825
        %v842 = vmul.f32 %v771, %v826
        %v843 = vmul.f32 %v773, %v827
        %v844 = vmul.f32 %v775, %v828
        %v845 = vmul.f32 %v777, %v829
        %v846 = vmul.f32 %v779, %v830
        %v847 = vmul.f32 %v781, %v831
        %v848 = vmul.f32 %v783, %v832
        %v849 = vmul.f32 %v785, %v833
        %v850 = vld [vmem:[#allocation3] sm:$0xf]
        %v851 = vpack.c.bf16 %v835, %v834
        %v852 = vpack.c.bf16 %v837, %v836
        %v853 = vpack.c.bf16 %v839, %v838
        %v854 = vpack.c.bf16 %v841, %v840
        %v855 = vpack.c.bf16 %v843, %v842
        %v856 = vpack.c.bf16 %v845, %v844
        %v857 = vpack.c.bf16 %v847, %v846
        %v858 = vpack.c.bf16 %v849, %v848
        %859 = vmatprep.subr.bf16.mxu0 0
        %860 = vmatpush1.bf16.xpose.msra.mxu0 %v858
        %861 = vmatprep.subr.bf16.mxu0 0
        %862 = vmatpush1.bf16.xpose.msra.mxu0 %v857
        %863 = vmatprep.subr.bf16.mxu0 0
        %864 = vmatpush1.bf16.xpose.msra.mxu0 %v856
        %865 = vmatprep.subr.bf16.mxu0 0
        %866 = vmatpush1.bf16.xpose.msra.mxu0 %v855
        %867 = vmatprep.subr.bf16.mxu0 0
        %868 = vmatpush1.bf16.xpose.msra.mxu0 %v854
        %869 = vmatprep.subr.bf16.mxu0 0
        %870 = vmatpush1.bf16.xpose.msra.mxu0 %v853
        %871 = vmatprep.subr.bf16.mxu0 0
        %872 = vmatpush1.bf16.xpose.msra.mxu0 %v852
        %873 = vmatprep.subr.bf16.mxu0 0
        %874 = vmatpush1.bf16.xpose.msra.mxu0 %v851
        %875 = vmatprep.subr.bf16.mxu0 0
        %876 = vmatpush2.bf16.xpose.msra.mxu0 0
        %877 = vmatprep.subr.bf16.mxu0 0
        %878 = vmatpush2.bf16.xpose.msra.mxu0 0
        %879 = vmatprep.subr.bf16.mxu0 0
        %880 = vmatpush2.bf16.xpose.msra.mxu0 0
        %881 = vmatprep.subr.bf16.mxu0 0
        %882 = vmatpush2.bf16.xpose.msra.mxu0 0
        %883 = vmatprep.subr.bf16.mxu0 0
        %884 = vmatpush2.bf16.xpose.msra.mxu0 0
        %885 = vmatprep.subr.bf16.mxu0 0
        %886 = vmatpush2.bf16.xpose.msra.mxu0 0
        %887 = vmatprep.subr.bf16.mxu0 0
        %888 = vmatpush2.bf16.xpose.msra.mxu0 0
        %889 = vmatprep.subr.bf16.mxu0 0
        %890 = vmatpush2.bf16.xpose.msra.mxu0 0
        %891 = vmatprep.mubr.bf16.mxu0 0
        %892 = vmatmul.mubr.bf16.gmra.mxu0 %v850
        %v893 = vpop.f32.mrf.mxu0
        %v894 = vadd.f32 0.0, %v893
        %v895 = vpop.f32.mrf.mxu0
        %v896 = vpop.f32.mrf.mxu0
        %v897 = vpop.f32.mrf.mxu0
        %898 = vdwg.mxu0
        %v899 = vld [vmem:[%s7] sm:$0xf]
        %v900 = vpack.c.bf16 %v894, %v894
        %v901 = vld [vmem:[%s8] sm:$0xff]
        %903 = vset.pattern.permute.xlu0 0
        %904 = vperm.xlu0 %903, %v901
        %v905 = vpop.permute.xlu0 %904
        %v908 = vsel %vm512, %v899, 0
        %v911 = vsel %vm516, %v900, 0
        %913 = vmatprep.subr.bf16.mxu0 0
        %914 = vmatpush1.bf16.msra.mxu0 0
        %915 = vmatprep.subr.bf16.mxu0 0
        %916 = vmatpush1.bf16.msra.mxu0 0
        %917 = vmatprep.subr.bf16.mxu0 0
        %918 = vmatpush1.bf16.msra.mxu0 0
        %919 = vmatprep.subr.bf16.mxu0 0
        %920 = vmatpush1.bf16.msra.mxu0 0
        %921 = vmatprep.subr.bf16.mxu0 0
        %922 = vmatpush1.bf16.msra.mxu0 0
        %923 = vmatprep.subr.bf16.mxu0 0
        %924 = vmatpush1.bf16.msra.mxu0 0
        %925 = vmatprep.subr.bf16.mxu0 0
        %926 = vmatpush1.bf16.msra.mxu0 0
        %927 = vmatprep.subr.bf16.mxu0 0
        %928 = vmatpush1.bf16.msra.mxu0 %v911
        %929 = vmatprep.subr.bf16.mxu0 0
        %930 = vmatpush2.bf16.msra.mxu0 0
        %931 = vmatprep.subr.bf16.mxu0 0
        %932 = vmatpush2.bf16.msra.mxu0 0
        %933 = vmatprep.subr.bf16.mxu0 0
        %934 = vmatpush2.bf16.msra.mxu0 0
        %935 = vmatprep.subr.bf16.mxu0 0
        %936 = vmatpush2.bf16.msra.mxu0 0
        %937 = vmatprep.subr.bf16.mxu0 0
        %938 = vmatpush2.bf16.msra.mxu0 0
        %939 = vmatprep.subr.bf16.mxu0 0
        %940 = vmatpush2.bf16.msra.mxu0 0
        %941 = vmatprep.subr.bf16.mxu0 0
        %942 = vmatpush2.bf16.msra.mxu0 0
        %943 = vmatprep.subr.bf16.mxu0 0
        %944 = vmatpush2.bf16.msra.mxu0 0
        %945 = vmatprep.mubr.bf16.mxu0 0
        %946 = vmatmul.mubr.bf16.gmra.mxu0 %v908
        %v947 = vpop.f32.mrf.mxu0
        %v948 = vadd.f32 %v905, %v947
        %v949 = vpop.f32.mrf.mxu0
        %v950 = vpop.f32.mrf.mxu0
        %v951 = vpop.f32.mrf.mxu0
        %952 = vdwg.mxu0
        %v953 = vadd.f32 %v499, %v948
        %954 = vst [vmem:[%s337] sm:$0xff] %v953
        %s955 = sand.u32 %s239, 1
        %s956 = scalar_lea.sflag [#allocation6], %s955
        %s957 = sand.u32 %s239, 1
        %s958 = smul.addr %s957, 8
        %s959 = scalar_lea.vmem [#allocation5], %s958
        // Predicated region
        $region61: #{tpu_custom_call.1} parent=55 // pred_check
          %p960 = pneg %p249
        $region62: #{tpu_custom_call.1} parent=55 // pred_check_branch
          %962 = sbr.rel (%p960) target = $region64
        $region63: #{tpu_custom_call.1} parent=55 // pred_region
          %s964 = ssub.s32 128, 128
          %965 = vsyncadd %s956, %s964
          %s966 = sadd.s32 %s28, %s27
          %s967 = smul.addr %s966, 128
          %s968 = scalar_lea.hbm %s9, %s967
          %s970 = sshll.u32 %s959, 4
          %s971 = int_to_ptr.vmem [resolvable:$true] %s970
          %973 = dma.vmem_to_hbm [thread:$0]  %s971, 128, %s968, %s956
        $region64: #{tpu_custom_call.1} parent=55 // pred_fallthru
          _
      $region56: #{tpu_custom_call.1} parent=5 // pred_fallthru
        _
      %p974 = scmp.le.s32.totalorder 2, %s18
      // Predicated region
      $region65: #{tpu_custom_call.1} parent=5 // pred_check
        %p975 = pneg %p974
      $region66: #{tpu_custom_call.1} parent=5 // pred_check_branch
        %977 = sbr.rel (%p975) target = $region68
      $region67: #{tpu_custom_call.1} parent=5 // pred_region
        %s978 = ssub.s32 %s18, 2
        // Predicated region
        $region69: #{tpu_custom_call.1} parent=67 // pred_check
          %p979 = pneg %p255
        $region70: #{tpu_custom_call.1} parent=67 // pred_check_branch
          %981 = sbr.rel (%p979) target = $region72
        $region71: #{tpu_custom_call.1} parent=67 // pred_region
          %s982 = sand.u32 %s240, 1
          %s983 = scalar_lea.sflag [#allocation6], %s982
          %s984 = sand.u32 %s240, 1
          %s985 = smul.addr %s984, 8
          %s986 = scalar_lea.vmem [#allocation5], %s985
          %987 = dma.done %s983, 128
        $region72: #{tpu_custom_call.1} parent=67 // pred_fallthru
          _
      $region68: #{tpu_custom_call.1} parent=5 // pred_fallthru
        _
    $region6: #{tpu_custom_call.1} parent=1 // loop_footer
      %s22 = sadd.s32 1, %s18
    $region7: #{tpu_custom_call.1} parent=1 // loop_footer_branch
      %17 = sbr.rel target = $region3
    $region8: #{tpu_custom_call.1} parent=1 // loop_exit
      _
    %988 = vsyncpa [#allocation6], 1
    %s989 = scalar_lea.sflag [#allocation6], 1
    %990 = vsyncpa %s989, 1

</llo_original>
